<compile_context>
chip_gen: v6e
topology: v6e:2x2x1
jax: 0.10.0
libtpu: 0.0.40
codegen_flags: <defaults>
</compile_context>

<pallas_src>
import jax
import jax.numpy as jnp
from jax.experimental import pallas as pl
from jax.experimental.pallas import tpu as pltpu

_BN_EPS = 1e-5


def _vmem_spec():
    # Whole-array blocks resident in VMEM (no grid tiling needed at these shapes).
    return pl.BlockSpec(memory_space=pltpu.MemorySpace.VMEM)


def _vmem_limit_bytes():
    # Raise the scoped-VMEM limit above the 16/32 MiB default, but clamp safely below
    # physical capacity (64 MiB per TC on v7x, 128 MiB on v5e/v6e).
    try:
        cap = int(pltpu.get_tpu_info().vmem_capacity_bytes)
    except Exception:
        cap = 64 * 1024 * 1024
    return max(32 * 1024 * 1024, min(cap - 16 * 1024 * 1024, 100 * 1024 * 1024))


# ---------------- fused Pallas kernel ----------------

def _make_sage_fused_kernel(num_layers):
    def kernel(a_ref, p_ref, x_ref, *args):
        # a_ref: [N, N]  bf16 row-normalized adjacency (mean-aggregation operator)
        # p_ref: [G, N]  bf16 one-hot graph-membership matrix (global_add_pool)
        # x_ref: [N, Fin] f32 node features
        # per layer: wl [Fin|H, H], wr [Fin|H, H], b [1, H], gamma [1, H], beta [1, H]
        layer_refs = args[: 5 * num_layers]
        z_out_ref = args[5 * num_layers]
        g_out_ref = args[5 * num_layers + 1]

        a = a_ref[...]          # stays VMEM-resident across all layers
        z = x_ref[...]
        zs = []
        for l in range(num_layers):
            wl, wr, b, gamma, beta = layer_refs[5 * l: 5 * l + 5]
            # Reassociated aggregation: A @ (z @ Wl) -> [N, H] intermediate (not [N, Fin]).
            msg = jnp.dot(z, wl[...], preferred_element_type=jnp.float32)            # [N, H]
            agg = jnp.dot(a, msg.astype(jnp.bfloat16),                               # bf16 MXU,
                          preferred_element_type=jnp.float32)                        # f32 accum
            h = agg + jnp.dot(z, wr[...], preferred_element_type=jnp.float32) + b[...]
            h = jnp.maximum(h, 0.0)                                                   # ReLU
            # BatchNorm1d, training-mode (biased) statistics, fused scale/shift epilogue.
            mean = jnp.mean(h, axis=0, keepdims=True)
            d = h - mean
            var = jnp.mean(d * d, axis=0, keepdims=True)
            scale = gamma[...] * jax.lax.rsqrt(var + _BN_EPS)
            z = d * scale + beta[...]
            zs.append(z)

        # Lane-dense [N, num_layers*H] slab -> single unmasked-store-friendly write,
        # and one MXU pass does global_add_pool for every layer at once.
        z_all = jnp.concatenate(zs, axis=1)
        z_out_ref[...] = z_all
        g_out_ref[...] = jnp.dot(p_ref[...].astype(jnp.float32), z_all,
                                 preferred_element_type=jnp.float32)
    return kernel


# ---------------- wrappers ----------------

def build_graph_operators(num_nodes, edge_index, batch, num_graphs):
    """Dense mean-aggregation operator A_norm [N,N] and pooling operator P [G,N] (bf16).

    These depend only on graph structure; for repeated forwards over the same graph
    they can be built once and reused across calls.
    """
    src, dst = edge_index[0], edge_index[1]
    # A[i, j] = (#edges j->i); mean aggregation divides by in-degree (0-deg rows stay 0,
    # matching PyG's mean aggregation).
    A = jnp.zeros((num_nodes, num_nodes), jnp.float32).at[dst, src].add(1.0)
    deg = jnp.sum(A, axis=1, keepdims=True)
    A_norm = (A / jnp.maximum(deg, 1.0)).astype(jnp.bfloat16)
    P = jnp.zeros((num_graphs, num_nodes), jnp.float32)
    P = P.at[batch, jnp.arange(num_nodes)].set(1.0).astype(jnp.bfloat16)
    return A_norm, P


def sage_forward(params, x, edge_index, batch, num_graphs):
    """Full SAGE.forward. Returns (z, g) = (concat per-node, concat per-graph)."""
    N = x.shape[0]
    num_layers = len(params)
    H = params[0][0].shape[1]
    A_norm, P = build_graph_operators(N, edge_index, batch, num_graphs)

    flat_params = []
    for layer_params in params:
        flat_params.extend(layer_params)

    kernel = _make_sage_fused_kernel(num_layers)
    z_all, g_all = pl.pallas_call(
        kernel,
        out_shape=(jax.ShapeDtypeStruct((N, num_layers * H), jnp.float32),
                   jax.ShapeDtypeStruct((num_graphs, num_layers * H), jnp.float32)),
        in_specs=[_vmem_spec()] * (3 + 5 * num_layers),
        out_specs=(_vmem_spec(), _vmem_spec()),
        compiler_params=pltpu.CompilerParams(vmem_limit_bytes=_vmem_limit_bytes()),
    )(A_norm, P, x, *flat_params)
    return z_all, g_all


# ---------------- deterministic parameter init ----------------

def init_params(key, input_dim, hidden_dim, num_layers):
    params = []
    in_dim = input_dim
    for _ in range(num_layers):
        key, k1, k2, k3 = jax.random.split(key, 4)
        bound = 1.0 / (in_dim ** 0.5)
        wl = jax.random.uniform(k1, (hidden_dim, in_dim), jnp.float32, -bound, bound)
        wr = jax.random.uniform(k2, (hidden_dim, in_dim), jnp.float32, -bound, bound)
        b = jax.random.uniform(k3, (1, hidden_dim), jnp.float32, -bound, bound)
        gamma = jnp.ones((1, hidden_dim), jnp.float32)   # BN weight init
        beta = jnp.zeros((1, hidden_dim), jnp.float32)   # BN bias init
        params.append((wl.T, wr.T, b, gamma, beta))       # store pre-transposed weights
        in_dim = hidden_dim
    return params


# ---------------- pure-JAX reference (mirrors the kernel's bf16 mixed precision) ----------------

def ref_forward(params, x, edge_index, batch, num_graphs):
    A_norm, P = build_graph_operators(x.shape[0], edge_index, batch, num_graphs)
    a = A_norm.astype(jnp.float32)
    p = P.astype(jnp.float32)
    z = x
    zs = []
    for (wl_t, wr_t, b, gamma, beta) in params:
        msg = (z @ wl_t).astype(jnp.bfloat16).astype(jnp.float32)
        h = a @ msg + z @ wr_t + b
        h = jnp.maximum(h, 0.0)
        mean = jnp.mean(h, axis=0, keepdims=True)
        d = h - mean
        var = jnp.mean(d * d, axis=0, keepdims=True)
        z = d * (gamma * jax.lax.rsqrt(var + _BN_EPS)) + beta
        zs.append(z)
    z_all = jnp.concatenate(zs, axis=1)
    return z_all, p @ z_all


if __name__ == "__main__":
    # Small synthetic graph: 16 nodes, 2 graphs, 40 edges.
    N, INPUT_DIM, HIDDEN_DIM, NUM_LAYERS, NUM_GRAPHS, E = 16, 16, 32, 2, 2, 40

    key = jax.random.PRNGKey(0)
    key, kx, ke1, ke2 = jax.random.split(key, 4)
    x = jax.random.normal(kx, (N, INPUT_DIM), jnp.float32)
    src = jax.random.randint(ke1, (E,), 0, N)
    dst = jax.random.randint(ke2, (E,), 0, N)
    edge_index = jnp.stack([src, dst], axis=0)            # [2, E]
    batch = jnp.concatenate([jnp.zeros(N // 2, jnp.int32),
                             jnp.ones(N - N // 2, jnp.int32)])  # [N]

    params = init_params(key, INPUT_DIM, HIDDEN_DIM, NUM_LAYERS)

    z_out, g_out = sage_forward(params, x, edge_index, batch, NUM_GRAPHS)
    z_out = jax.block_until_ready(z_out)
    g_out = jax.block_until_ready(g_out)

    z_ref, g_ref = ref_forward(params, x, edge_index, batch, NUM_GRAPHS)
    assert z_out.shape == (N, HIDDEN_DIM * NUM_LAYERS)
    assert g_out.shape == (NUM_GRAPHS, HIDDEN_DIM * NUM_LAYERS)
    assert jnp.allclose(z_out, z_ref, atol=2e-3, rtol=2e-3)
    assert jnp.allclose(g_out, g_ref, atol=2e-3, rtol=2e-3)

    print("KERNEL_OK")
</pallas_src>

<mosaic_0001>
module attributes {stable_mosaic.version = 11 : i64} {
  func.func @kernel(%arg0: memref<16x16xbf16, #tpu.memory_space<vmem>>, %arg1: memref<2x16xbf16, #tpu.memory_space<vmem>>, %arg2: memref<16x16xf32, #tpu.memory_space<vmem>>, %arg3: memref<16x32xf32, #tpu.memory_space<vmem>>, %arg4: memref<16x32xf32, #tpu.memory_space<vmem>>, %arg5: memref<1x32xf32, #tpu.memory_space<vmem>>, %arg6: memref<1x32xf32, #tpu.memory_space<vmem>>, %arg7: memref<1x32xf32, #tpu.memory_space<vmem>>, %arg8: memref<32x32xf32, #tpu.memory_space<vmem>>, %arg9: memref<32x32xf32, #tpu.memory_space<vmem>>, %arg10: memref<1x32xf32, #tpu.memory_space<vmem>>, %arg11: memref<1x32xf32, #tpu.memory_space<vmem>>, %arg12: memref<1x32xf32, #tpu.memory_space<vmem>>, %arg13: memref<16x64xf32, #tpu.memory_space<vmem>>, %arg14: memref<2x64xf32, #tpu.memory_space<vmem>>) attributes {dimension_semantics = [], scalar_prefetch = 0 : i64, scratch_operands = 0 : i64, tpu.core_type = #tpu.core_type<tc>} {
    %c0 = arith.constant 0 : index
    %c0_0 = arith.constant 0 : index
    %0 = vector.load %arg0[%c0, %c0_0] : memref<16x16xbf16, #tpu.memory_space<vmem>>, vector<16x16xbf16>
    %c0_1 = arith.constant 0 : index
    %c0_2 = arith.constant 0 : index
    %1 = vector.load %arg2[%c0_1, %c0_2] : memref<16x16xf32, #tpu.memory_space<vmem>>, vector<16x16xf32>
    %c0_3 = arith.constant 0 : index
    %c0_4 = arith.constant 0 : index
    %2 = vector.load %arg3[%c0_3, %c0_4] : memref<16x32xf32, #tpu.memory_space<vmem>>, vector<16x32xf32>
    %cst = arith.constant dense<0.000000e+00> : vector<16x32xf32>
    %3 = tpu.matmul %1, %2, %cst {dimension_numbers = #tpu.dot_dimension_numbers<[1], [0], [0], [1], [0, 0, 1, 1], [], []>} : vector<16x16xf32>, vector<16x32xf32>, vector<16x32xf32> -> vector<16x32xf32>
    %4 = arith.truncf %3 : vector<16x32xf32> to vector<16x32xbf16>
    %cst_5 = arith.constant dense<0.000000e+00> : vector<16x32xf32>
    %5 = tpu.matmul %0, %4, %cst_5 {dimension_numbers = #tpu.dot_dimension_numbers<[1], [0], [0], [1], [0, 0, 1, 1], [], []>} : vector<16x16xbf16>, vector<16x32xbf16>, vector<16x32xf32> -> vector<16x32xf32>
    %c0_6 = arith.constant 0 : index
    %c0_7 = arith.constant 0 : index
    %6 = vector.load %arg4[%c0_6, %c0_7] : memref<16x32xf32, #tpu.memory_space<vmem>>, vector<16x32xf32>
    %cst_8 = arith.constant dense<0.000000e+00> : vector<16x32xf32>
    %7 = tpu.matmul %1, %6, %cst_8 {dimension_numbers = #tpu.dot_dimension_numbers<[1], [0], [0], [1], [0, 0, 1, 1], [], []>} : vector<16x16xf32>, vector<16x32xf32>, vector<16x32xf32> -> vector<16x32xf32>
    %8 = arith.addf %5, %7 : vector<16x32xf32>
    %c0_9 = arith.constant 0 : index
    %c0_10 = arith.constant 0 : index
    %9 = vector.load %arg5[%c0_9, %c0_10] : memref<1x32xf32, #tpu.memory_space<vmem>>, vector<1x32xf32>
    %10 = vector.broadcast %9 : vector<1x32xf32> to vector<16x32xf32>
    %11 = arith.addf %8, %10 : vector<16x32xf32>
    %cst_11 = arith.constant 0.000000e+00 : f32
    %12 = vector.broadcast %cst_11 : f32 to vector<16x32xf32>
    %13 = arith.maximumf %11, %12 : vector<16x32xf32>
    %cst_12 = arith.constant dense<0.000000e+00> : vector<32xf32>
    %14 = vector.multi_reduction <add>, %13, %cst_12 [0] : vector<16x32xf32> to vector<32xf32>
    %15 = vector.shape_cast %14 : vector<32xf32> to vector<1x32xf32>
    %cst_13 = arith.constant 1.600000e+01 : f32
    %16 = vector.broadcast %cst_13 : f32 to vector<1x32xf32>
    %17 = arith.divf %15, %16 : vector<1x32xf32>
    %18 = vector.broadcast %17 : vector<1x32xf32> to vector<16x32xf32>
    %19 = arith.subf %13, %18 : vector<16x32xf32>
    %20 = arith.mulf %19, %19 : vector<16x32xf32>
    %cst_14 = arith.constant dense<0.000000e+00> : vector<32xf32>
    %21 = vector.multi_reduction <add>, %20, %cst_14 [0] : vector<16x32xf32> to vector<32xf32>
    %22 = vector.shape_cast %21 : vector<32xf32> to vector<1x32xf32>
    %cst_15 = arith.constant 1.600000e+01 : f32
    %23 = vector.broadcast %cst_15 : f32 to vector<1x32xf32>
    %24 = arith.divf %22, %23 : vector<1x32xf32>
    %c0_16 = arith.constant 0 : index
    %c0_17 = arith.constant 0 : index
    %25 = vector.load %arg6[%c0_16, %c0_17] : memref<1x32xf32, #tpu.memory_space<vmem>>, vector<1x32xf32>
    %cst_18 = arith.constant 9.99999974E-6 : f32
    %26 = vector.broadcast %cst_18 : f32 to vector<1x32xf32>
    %27 = arith.addf %24, %26 : vector<1x32xf32>
    %28 = math.rsqrt %27 : vector<1x32xf32>
    %29 = arith.mulf %25, %28 : vector<1x32xf32>
    %30 = vector.broadcast %29 : vector<1x32xf32> to vector<16x32xf32>
    %31 = arith.mulf %19, %30 : vector<16x32xf32>
    %c0_19 = arith.constant 0 : index
    %c0_20 = arith.constant 0 : index
    %32 = vector.load %arg7[%c0_19, %c0_20] : memref<1x32xf32, #tpu.memory_space<vmem>>, vector<1x32xf32>
    %33 = vector.broadcast %32 : vector<1x32xf32> to vector<16x32xf32>
    %34 = arith.addf %31, %33 : vector<16x32xf32>
    %c0_21 = arith.constant 0 : index
    %c0_22 = arith.constant 0 : index
    %35 = vector.load %arg8[%c0_21, %c0_22] : memref<32x32xf32, #tpu.memory_space<vmem>>, vector<32x32xf32>
    %cst_23 = arith.constant dense<0.000000e+00> : vector<16x32xf32>
    %36 = tpu.matmul %34, %35, %cst_23 {dimension_numbers = #tpu.dot_dimension_numbers<[1], [0], [0], [1], [0, 0, 1, 1], [], []>} : vector<16x32xf32>, vector<32x32xf32>, vector<16x32xf32> -> vector<16x32xf32>
    %37 = arith.truncf %36 : vector<16x32xf32> to vector<16x32xbf16>
    %cst_24 = arith.constant dense<0.000000e+00> : vector<16x32xf32>
    %38 = tpu.matmul %0, %37, %cst_24 {dimension_numbers = #tpu.dot_dimension_numbers<[1], [0], [0], [1], [0, 0, 1, 1], [], []>} : vector<16x16xbf16>, vector<16x32xbf16>, vector<16x32xf32> -> vector<16x32xf32>
    %c0_25 = arith.constant 0 : index
    %c0_26 = arith.constant 0 : index
    %39 = vector.load %arg9[%c0_25, %c0_26] : memref<32x32xf32, #tpu.memory_space<vmem>>, vector<32x32xf32>
    %cst_27 = arith.constant dense<0.000000e+00> : vector<16x32xf32>
    %40 = tpu.matmul %34, %39, %cst_27 {dimension_numbers = #tpu.dot_dimension_numbers<[1], [0], [0], [1], [0, 0, 1, 1], [], []>} : vector<16x32xf32>, vector<32x32xf32>, vector<16x32xf32> -> vector<16x32xf32>
    %41 = arith.addf %38, %40 : vector<16x32xf32>
    %c0_28 = arith.constant 0 : index
    %c0_29 = arith.constant 0 : index
    %42 = vector.load %arg10[%c0_28, %c0_29] : memref<1x32xf32, #tpu.memory_space<vmem>>, vector<1x32xf32>
    %43 = vector.broadcast %42 : vector<1x32xf32> to vector<16x32xf32>
    %44 = arith.addf %41, %43 : vector<16x32xf32>
    %cst_30 = arith.constant 0.000000e+00 : f32
    %45 = vector.broadcast %cst_30 : f32 to vector<16x32xf32>
    %46 = arith.maximumf %44, %45 : vector<16x32xf32>
    %cst_31 = arith.constant dense<0.000000e+00> : vector<32xf32>
    %47 = vector.multi_reduction <add>, %46, %cst_31 [0] : vector<16x32xf32> to vector<32xf32>
    %48 = vector.shape_cast %47 : vector<32xf32> to vector<1x32xf32>
    %cst_32 = arith.constant 1.600000e+01 : f32
    %49 = vector.broadcast %cst_32 : f32 to vector<1x32xf32>
    %50 = arith.divf %48, %49 : vector<1x32xf32>
    %51 = vector.broadcast %50 : vector<1x32xf32> to vector<16x32xf32>
    %52 = arith.subf %46, %51 : vector<16x32xf32>
    %53 = arith.mulf %52, %52 : vector<16x32xf32>
    %cst_33 = arith.constant dense<0.000000e+00> : vector<32xf32>
    %54 = vector.multi_reduction <add>, %53, %cst_33 [0] : vector<16x32xf32> to vector<32xf32>
    %55 = vector.shape_cast %54 : vector<32xf32> to vector<1x32xf32>
    %cst_34 = arith.constant 1.600000e+01 : f32
    %56 = vector.broadcast %cst_34 : f32 to vector<1x32xf32>
    %57 = arith.divf %55, %56 : vector<1x32xf32>
    %c0_35 = arith.constant 0 : index
    %c0_36 = arith.constant 0 : index
    %58 = vector.load %arg11[%c0_35, %c0_36] : memref<1x32xf32, #tpu.memory_space<vmem>>, vector<1x32xf32>
    %cst_37 = arith.constant 9.99999974E-6 : f32
    %59 = vector.broadcast %cst_37 : f32 to vector<1x32xf32>
    %60 = arith.addf %57, %59 : vector<1x32xf32>
    %61 = math.rsqrt %60 : vector<1x32xf32>
    %62 = arith.mulf %58, %61 : vector<1x32xf32>
    %63 = vector.broadcast %62 : vector<1x32xf32> to vector<16x32xf32>
    %64 = arith.mulf %52, %63 : vector<16x32xf32>
    %c0_38 = arith.constant 0 : index
    %c0_39 = arith.constant 0 : index
    %65 = vector.load %arg12[%c0_38, %c0_39] : memref<1x32xf32, #tpu.memory_space<vmem>>, vector<1x32xf32>
    %66 = vector.broadcast %65 : vector<1x32xf32> to vector<16x32xf32>
    %67 = arith.addf %64, %66 : vector<16x32xf32>
    %68 = tpu.concatenate %34, %67 in 1 : vector<16x32xf32>, vector<16x32xf32> -> vector<16x64xf32>
    %c0_40 = arith.constant 0 : index
    %c0_41 = arith.constant 0 : index
    %69 = vector.load %arg13[%c0_40, %c0_41] : memref<16x64xf32, #tpu.memory_space<vmem>>, vector<16x64xf32>
    tpu.vector_store %arg13[%c0_40, %c0_41], %68 {strides = array<i32>} : memref<16x64xf32, #tpu.memory_space<vmem>>, vector<16x64xf32>,
    %c0_42 = arith.constant 0 : index
    %c0_43 = arith.constant 0 : index
    %70 = vector.load %arg1[%c0_42, %c0_43] : memref<2x16xbf16, #tpu.memory_space<vmem>>, vector<2x16xbf16>
    %71 = arith.extf %70 : vector<2x16xbf16> to vector<2x16xf32>
    %cst_44 = arith.constant dense<0.000000e+00> : vector<2x64xf32>
    %72 = tpu.matmul %71, %68, %cst_44 {dimension_numbers = #tpu.dot_dimension_numbers<[1], [0], [0], [1], [0, 0, 1, 1], [], []>} : vector<2x16xf32>, vector<16x64xf32>, vector<2x64xf32> -> vector<2x64xf32>
    %c0_45 = arith.constant 0 : index
    %c0_46 = arith.constant 0 : index
    %73 = vector.load %arg14[%c0_45, %c0_46] : memref<2x64xf32, #tpu.memory_space<vmem>>, vector<2x64xf32>
    tpu.vector_store %arg14[%c0_45, %c0_46], %72 {strides = array<i32>} : memref<2x64xf32, #tpu.memory_space<vmem>>, vector<2x64xf32>,
    return
  }
}

</mosaic_0001>

<llo_original>
// kernel: tpu_custom_call.1
$region0: #{tpu_custom_call.1}
  #allocation0 [shape = 'u32[]', space=smem, size = 0x4, offset = 0x4, fixed_abs, tag = 'smem constant byte address 0x4 - core index']
  #allocation1 [shape = 'u32[144,128]{1,0:T(1,128)}', space=vmem, size = 0x12000, scoped, tag = 'internal scratch']
  %s0 = inlined_call_operand.hbm [shape: bf16[16,16], index: 0, kind: input, shape index: {}]
  %s1 = inlined_call_operand.vmem [shape: bf16[2,16], index: 1, kind: input, shape index: {}]
  %s2 = inlined_call_operand.hbm [shape: f32[16,16], index: 2, kind: input, shape index: {}]
  %s3 = inlined_call_operand.hbm [shape: f32[16,32], index: 3, kind: input, shape index: {}]
  %s4 = inlined_call_operand.hbm [shape: f32[16,32], index: 4, kind: input, shape index: {}]
  %s5 = inlined_call_operand.vmem [shape: f32[1,32], index: 5, kind: input, shape index: {}]
  %s6 = inlined_call_operand.vmem [shape: f32[1,32], index: 6, kind: input, shape index: {}]
  %s7 = inlined_call_operand.vmem [shape: f32[1,32], index: 7, kind: input, shape index: {}]
  %s8 = inlined_call_operand.hbm [shape: f32[32,32], index: 8, kind: input, shape index: {}]
  %s9 = inlined_call_operand.hbm [shape: f32[32,32], index: 9, kind: input, shape index: {}]
  %s10 = inlined_call_operand.vmem [shape: f32[1,32], index: 10, kind: input, shape index: {}]
  %s11 = inlined_call_operand.vmem [shape: f32[1,32], index: 11, kind: input, shape index: {}]
  %s12 = inlined_call_operand.vmem [shape: f32[1,32], index: 12, kind: input, shape index: {}]
  %s13 = inlined_call_operand.hbm [shape: f32[16,64], index: 13, kind: output, shape index: {0}]
  %s14 = inlined_call_operand.hbm [shape: f32[2,64], index: 14, kind: output, shape index: {1}]
  %15 = xla_tuple %s13, %s14
  %s16 = sld [smem:[#allocation0]]
  $region94: #{tpu_custom_call.1} parent=0
    _
  %s18 = ssub.s32 1, %s16
  %s19 = scalar_select 0, %s18, %s16
  $region1: #{tpu_custom_call.1} parent=0
    #allocation2 [shape = 'u8[4096]{0}', space=vmem, size = 0x1000, scoped, tag = 'input window, operand 0, single buffered']
    #allocation3 [shape = 's32[1]{0}', space=sflag, size = 0x4, scoped, tag = 'scoped memory for tpu_custom_call.1']
    #allocation4 [shape = 's32[1]{0}', space=sflag, size = 0x4, scoped, tag = 'scoped memory for tpu_custom_call.1']
    #allocation5 [shape = 'u8[8192]{0}', space=vmem, size = 0x2000, scoped, tag = 'input window, operand 2, single buffered']
    #allocation6 [shape = 's32[1]{0}', space=sflag, size = 0x4, scoped, tag = 'scoped memory for tpu_custom_call.1']
    #allocation7 [shape = 'u8[8192]{0}', space=vmem, size = 0x2000, scoped, tag = 'input window, operand 3, single buffered']
    #allocation8 [shape = 'u8[8192]{0}', space=vmem, size = 0x2000, scoped, tag = 'input window, operand 4, single buffered']
    #allocation9 [shape = 's32[1]{0}', space=sflag, size = 0x4, scoped, tag = 'scoped memory for tpu_custom_call.1']
    #allocation10 [shape = 'u8[16384]{0}', space=vmem, size = 0x4000, scoped, tag = 'input window, operand 8, single buffered']
    #allocation11 [shape = 'u8[16384]{0}', space=vmem, size = 0x4000, scoped, tag = 'input window, operand 9, single buffered']
    #allocation12 [shape = 's32[1]{0}', space=sflag, size = 0x4, scoped, tag = 'scoped memory for tpu_custom_call.1']
    #allocation13 [shape = 'u8[8192]{0}', space=vmem, size = 0x2000, scoped, tag = 'output window, operand 0, single buffered']
    #allocation14 [shape = 'u8[1024]{0}', space=vmem, size = 0x400, scoped, tag = 'output window, operand 1, single buffered']
    #allocation15 [shape = 's32[1]{0}', space=sflag, size = 0x4, scoped, tag = 'scoped memory for tpu_custom_call.1']
    %20 = vsyncpa [#allocation3], 0
    %21 = vsyncpa [#allocation6], 0
    %22 = vsyncpa [#allocation9], 0
    %23 = vsyncpa [#allocation12], 0
    %24 = vsyncpa [#allocation4], 0
    %25 = vsyncpa [#allocation15], 0
    // Predicated region
    $region2: #{tpu_custom_call.1} parent=1 // pred_check
      _
    $region3: #{tpu_custom_call.1} parent=1 // pred_check_branch
      %27 = sbr.rel (0) target = $region5
    $region4: #{tpu_custom_call.1} parent=1 // pred_region
      %s29 = ssub.s32 128, 128
      %30 = vsyncadd [#allocation3], %s29
      %s31 = sshll.u32 [#allocation2], 4
      %s32 = int_to_ptr.vmem [resolvable:$true] %s31
      %37 = dma.hbm_to_vmem [thread:$0]  %s0, 128, %s32, [#allocation3], 64, 64, 4
    $region5: #{tpu_custom_call.1} parent=1 // pred_fallthru
      _
    // Predicated region
    $region6: #{tpu_custom_call.1} parent=1 // pred_check
      _
    $region7: #{tpu_custom_call.1} parent=1 // pred_check_branch
      %39 = sbr.rel (0) target = $region9
    $region8: #{tpu_custom_call.1} parent=1 // pred_region
      _
    $region9: #{tpu_custom_call.1} parent=1 // pred_fallthru
      _
    // Predicated region
    $region10: #{tpu_custom_call.1} parent=1 // pred_check
      _
    $region11: #{tpu_custom_call.1} parent=1 // pred_check_branch
      %41 = sbr.rel (0) target = $region13
    $region12: #{tpu_custom_call.1} parent=1 // pred_region
      %s43 = ssub.s32 256, 256
      %44 = vsyncadd [#allocation6], %s43
      %s45 = sshll.u32 [#allocation5], 4
      %s46 = int_to_ptr.vmem [resolvable:$true] %s45
      %51 = dma.hbm_to_vmem [thread:$0]  %s2, 256, %s46, [#allocation6], 128, 128, 8
    $region13: #{tpu_custom_call.1} parent=1 // pred_fallthru
      _
    // Predicated region
    $region14: #{tpu_custom_call.1} parent=1 // pred_check
      _
    $region15: #{tpu_custom_call.1} parent=1 // pred_check_branch
      %53 = sbr.rel (0) target = $region17
    $region16: #{tpu_custom_call.1} parent=1 // pred_region
      %s55 = ssub.s32 256, 256
      %56 = vsyncadd [#allocation6], %s55
      %s57 = sshll.u32 [#allocation7], 4
      %s58 = int_to_ptr.vmem [resolvable:$true] %s57
      %63 = dma.hbm_to_vmem [thread:$0]  %s3, 256, %s58, [#allocation6], 128, 128, 8
    $region17: #{tpu_custom_call.1} parent=1 // pred_fallthru
      _
    // Predicated region
    $region18: #{tpu_custom_call.1} parent=1 // pred_check
      _
    $region19: #{tpu_custom_call.1} parent=1 // pred_check_branch
      %65 = sbr.rel (0) target = $region21
    $region20: #{tpu_custom_call.1} parent=1 // pred_region
      %s67 = ssub.s32 256, 256
      %68 = vsyncadd [#allocation9], %s67
      %s69 = sshll.u32 [#allocation8], 4
      %s70 = int_to_ptr.vmem [resolvable:$true] %s69
      %75 = dma.hbm_to_vmem [thread:$0]  %s4, 256, %s70, [#allocation9], 128, 128, 8
    $region21: #{tpu_custom_call.1} parent=1 // pred_fallthru
      _
    // Predicated region
    $region22: #{tpu_custom_call.1} parent=1 // pred_check
      _
    $region23: #{tpu_custom_call.1} parent=1 // pred_check_branch
      %77 = sbr.rel (0) target = $region25
    $region24: #{tpu_custom_call.1} parent=1 // pred_region
      _
    $region25: #{tpu_custom_call.1} parent=1 // pred_fallthru
      _
    // Predicated region
    $region26: #{tpu_custom_call.1} parent=1 // pred_check
      _
    $region27: #{tpu_custom_call.1} parent=1 // pred_check_branch
      %79 = sbr.rel (0) target = $region29
    $region28: #{tpu_custom_call.1} parent=1 // pred_region
      _
    $region29: #{tpu_custom_call.1} parent=1 // pred_fallthru
      _
    // Predicated region
    $region30: #{tpu_custom_call.1} parent=1 // pred_check
      _
    $region31: #{tpu_custom_call.1} parent=1 // pred_check_branch
      %81 = sbr.rel (0) target = $region33
    $region32: #{tpu_custom_call.1} parent=1 // pred_region
      _
    $region33: #{tpu_custom_call.1} parent=1 // pred_fallthru
      _
    // Predicated region
    $region34: #{tpu_custom_call.1} parent=1 // pred_check
      _
    $region35: #{tpu_custom_call.1} parent=1 // pred_check_branch
      %83 = sbr.rel (0) target = $region37
    $region36: #{tpu_custom_call.1} parent=1 // pred_region
      %s85 = ssub.s32 512, 512
      %86 = vsyncadd [#allocation9], %s85
      %s87 = sshll.u32 [#allocation10], 4
      %s88 = int_to_ptr.vmem [resolvable:$true] %s87
      %93 = dma.hbm_to_vmem [thread:$0]  %s8, 512, %s88, [#allocation9], 128, 128, 8
    $region37: #{tpu_custom_call.1} parent=1 // pred_fallthru
      _
    // Predicated region
    $region38: #{tpu_custom_call.1} parent=1 // pred_check
      _
    $region39: #{tpu_custom_call.1} parent=1 // pred_check_branch
      %95 = sbr.rel (0) target = $region41
    $region40: #{tpu_custom_call.1} parent=1 // pred_region
      %s97 = ssub.s32 512, 512
      %98 = vsyncadd [#allocation12], %s97
      %s99 = sshll.u32 [#allocation11], 4
      %s100 = int_to_ptr.vmem [resolvable:$true] %s99
      %105 = dma.hbm_to_vmem [thread:$0]  %s9, 512, %s100, [#allocation12], 128, 128, 8
    $region41: #{tpu_custom_call.1} parent=1 // pred_fallthru
      _
    // Predicated region
    $region42: #{tpu_custom_call.1} parent=1 // pred_check
      _
    $region43: #{tpu_custom_call.1} parent=1 // pred_check_branch
      %107 = sbr.rel (0) target = $region45
    $region44: #{tpu_custom_call.1} parent=1 // pred_region
      _
    $region45: #{tpu_custom_call.1} parent=1 // pred_fallthru
      _
    // Predicated region
    $region46: #{tpu_custom_call.1} parent=1 // pred_check
      _
    $region47: #{tpu_custom_call.1} parent=1 // pred_check_branch
      %109 = sbr.rel (0) target = $region49
    $region48: #{tpu_custom_call.1} parent=1 // pred_region
      _
    $region49: #{tpu_custom_call.1} parent=1 // pred_fallthru
      _
    // Predicated region
    $region50: #{tpu_custom_call.1} parent=1 // pred_check
      _
    $region51: #{tpu_custom_call.1} parent=1 // pred_check_branch
      %111 = sbr.rel (0) target = $region53
    $region52: #{tpu_custom_call.1} parent=1 // pred_region
      _
    $region53: #{tpu_custom_call.1} parent=1 // pred_fallthru
      _
    // Predicated region
    $region54: #{tpu_custom_call.1} parent=1 // pred_check
      _
    $region55: #{tpu_custom_call.1} parent=1 // pred_check_branch
      %113 = sbr.rel (0) target = $region57
    $region56: #{tpu_custom_call.1} parent=1 // pred_region
      %114 = dma.done [#allocation3], 128
    $region57: #{tpu_custom_call.1} parent=1 // pred_fallthru
      _
    // Predicated region
    $region58: #{tpu_custom_call.1} parent=1 // pred_check
      _
    $region59: #{tpu_custom_call.1} parent=1 // pred_check_branch
      %116 = sbr.rel (0) target = $region61
    $region60: #{tpu_custom_call.1} parent=1 // pred_region
      %117 = dma.done [#allocation6], 256
    $region61: #{tpu_custom_call.1} parent=1 // pred_fallthru
      _
    // Predicated region
    $region62: #{tpu_custom_call.1} parent=1 // pred_check
      _
    $region63: #{tpu_custom_call.1} parent=1 // pred_check_branch
      %119 = sbr.rel (0) target = $region65
    $region64: #{tpu_custom_call.1} parent=1 // pred_region
      %120 = dma.done [#allocation6], 256
    $region65: #{tpu_custom_call.1} parent=1 // pred_fallthru
      _
    // Predicated region
    $region66: #{tpu_custom_call.1} parent=1 // pred_check
      _
    $region67: #{tpu_custom_call.1} parent=1 // pred_check_branch
      %122 = sbr.rel (0) target = $region69
    $region68: #{tpu_custom_call.1} parent=1 // pred_region
      %123 = dma.done [#allocation9], 256
    $region69: #{tpu_custom_call.1} parent=1 // pred_fallthru
      _
    // Predicated region
    $region70: #{tpu_custom_call.1} parent=1 // pred_check
      _
    $region71: #{tpu_custom_call.1} parent=1 // pred_check_branch
      %125 = sbr.rel (0) target = $region73
    $region72: #{tpu_custom_call.1} parent=1 // pred_region
      %126 = dma.done [#allocation9], 512
    $region73: #{tpu_custom_call.1} parent=1 // pred_fallthru
      _
    // Predicated region
    $region74: #{tpu_custom_call.1} parent=1 // pred_check
      _
    $region75: #{tpu_custom_call.1} parent=1 // pred_check_branch
      %128 = sbr.rel (0) target = $region77
    $region76: #{tpu_custom_call.1} parent=1 // pred_region
      %129 = dma.done [#allocation12], 512
    $region77: #{tpu_custom_call.1} parent=1 // pred_fallthru
      _
    %v131 = vld [vmem:[#allocation2] sm:$0xf]
    %v132 = vld [vmem:[#allocation2 + $0x4] sm:$0xf]
    %v133 = vld [vmem:[#allocation5] sm:$0xff]
    %v134 = vld [vmem:[#allocation5 + $0x8] sm:$0xff]
    %v135 = vld [vmem:[#allocation7] sm:$0xff]
    %v136 = vld [vmem:[#allocation7 + $0x8] sm:$0xff]
    %vm137 = vcmask 130048
    %v139 = vsel %vm137, %v133, 0
    %v142 = vsel %vm137, %v134, 0
    %144 = vmatprep.subr.mxu0 0.0
    %145 = vmatpush1.msra.mxu0 0.0
    %146 = vmatprep.subr.mxu0 0.0
    %147 = vmatpush1.msra.mxu0 0.0
    %148 = vmatprep.subr.mxu0 0.0
    %149 = vmatpush1.msra.mxu0 0.0
    %150 = vmatprep.subr.mxu0 0.0
    %151 = vmatpush1.msra.mxu0 0.0
    %152 = vmatprep.subr.mxu0 0.0
    %153 = vmatpush1.msra.mxu0 0.0
    %154 = vmatprep.subr.mxu0 0.0
    %155 = vmatpush1.msra.mxu0 0.0
    %156 = vmatprep.subr.mxu0 0.0
    %157 = vmatpush1.msra.mxu0 0.0
    %158 = vmatprep.subr.mxu0 0.0
    %159 = vmatpush1.msra.mxu0 0.0
    %160 = vmatprep.subr.mxu0 0.0
    %161 = vmatpush1.msra.mxu0 0.0
    %162 = vmatprep.subr.mxu0 0.0
    %163 = vmatpush1.msra.mxu0 0.0
    %164 = vmatprep.subr.mxu0 0.0
    %165 = vmatpush1.msra.mxu0 0.0
    %166 = vmatprep.subr.mxu0 0.0
    %167 = vmatpush1.msra.mxu0 0.0
    %168 = vmatprep.subr.mxu0 0.0
    %169 = vmatpush1.msra.mxu0 0.0
    %170 = vmatprep.subr.mxu0 0.0
    %171 = vmatpush1.msra.mxu0 0.0
    %172 = vmatprep.subr.mxu0 0.0
    %173 = vmatpush1.msra.mxu0 %v136
    %174 = vmatprep.subr.mxu0 0.0
    %175 = vmatpush1.msra.mxu0 %v135
    %176 = vmatprep.subr.mxu0 0.0
    %177 = vmatpush2.msra.mxu0 0.0
    %178 = vmatprep.subr.mxu0 0.0
    %179 = vmatpush2.msra.mxu0 0.0
    %180 = vmatprep.subr.mxu0 0.0
    %181 = vmatpush2.msra.mxu0 0.0
    %182 = vmatprep.subr.mxu0 0.0
    %183 = vmatpush2.msra.mxu0 0.0
    %184 = vmatprep.subr.mxu0 0.0
    %185 = vmatpush2.msra.mxu0 0.0
    %186 = vmatprep.subr.mxu0 0.0
    %187 = vmatpush2.msra.mxu0 0.0
    %188 = vmatprep.subr.mxu0 0.0
    %189 = vmatpush2.msra.mxu0 0.0
    %190 = vmatprep.subr.mxu0 0.0
    %191 = vmatpush2.msra.mxu0 0.0
    %192 = vmatprep.subr.mxu0 0.0
    %193 = vmatpush2.msra.mxu0 0.0
    %194 = vmatprep.subr.mxu0 0.0
    %195 = vmatpush2.msra.mxu0 0.0
    %196 = vmatprep.subr.mxu0 0.0
    %197 = vmatpush2.msra.mxu0 0.0
    %198 = vmatprep.subr.mxu0 0.0
    %199 = vmatpush2.msra.mxu0 0.0
    %200 = vmatprep.subr.mxu0 0.0
    %201 = vmatpush2.msra.mxu0 0.0
    %202 = vmatprep.subr.mxu0 0.0
    %203 = vmatpush2.msra.mxu0 0.0
    %204 = vmatprep.subr.mxu0 0.0
    %205 = vmatpush2.msra.mxu0 0.0
    %206 = vmatprep.subr.mxu0 0.0
    %207 = vmatpush2.msra.mxu0 0.0
    %208 = vmatprep.mubr.f32.mxu0 0.0
    %209 = vmatmul.mubr.f32.gmra.mxu0 %v139
    %v210 = vpop.f32.mrf.mxu0
    %v211 = vadd.f32 0.0, %v210
    %v212 = vpop.f32.mrf.mxu0
    %213 = vmatprep.mubr.f32.mxu0 0.0
    %214 = vmatmul.mubr.f32.gmra.mxu0 %v142
    %v215 = vpop.f32.mrf.mxu0
    %v216 = vadd.f32 0.0, %v215
    %v217 = vpop.f32.mrf.mxu0
    %218 = vdwg.mxu0
    %v219 = vpack.c.bf16 %v216, %v211
    %v220 = vld [vmem:[#allocation8] sm:$0xff]
    %v221 = vld [vmem:[#allocation8 + $0x8] sm:$0xff]
    %222 = vmatprep.subr.mxu0 0.0
    %223 = vmatpush1.msra.mxu0 0.0
    %224 = vmatprep.subr.mxu0 0.0
    %225 = vmatpush1.msra.mxu0 0.0
    %226 = vmatprep.subr.mxu0 0.0
    %227 = vmatpush1.msra.mxu0 0.0
    %228 = vmatprep.subr.mxu0 0.0
    %229 = vmatpush1.msra.mxu0 0.0
    %230 = vmatprep.subr.mxu0 0.0
    %231 = vmatpush1.msra.mxu0 0.0
    %232 = vmatprep.subr.mxu0 0.0
    %233 = vmatpush1.msra.mxu0 0.0
    %234 = vmatprep.subr.mxu0 0.0
    %235 = vmatpush1.msra.mxu0 0.0
    %236 = vmatprep.subr.mxu0 0.0
    %237 = vmatpush1.msra.mxu0 0.0
    %238 = vmatprep.subr.mxu0 0.0
    %239 = vmatpush1.msra.mxu0 0.0
    %240 = vmatprep.subr.mxu0 0.0
    %241 = vmatpush1.msra.mxu0 0.0
    %242 = vmatprep.subr.mxu0 0.0
    %243 = vmatpush1.msra.mxu0 0.0
    %244 = vmatprep.subr.mxu0 0.0
    %245 = vmatpush1.msra.mxu0 0.0
    %246 = vmatprep.subr.mxu0 0.0
    %247 = vmatpush1.msra.mxu0 0.0
    %248 = vmatprep.subr.mxu0 0.0
    %249 = vmatpush1.msra.mxu0 0.0
    %250 = vmatprep.subr.mxu0 0.0
    %251 = vmatpush1.msra.mxu0 %v221
    %252 = vmatprep.subr.mxu0 0.0
    %253 = vmatpush1.msra.mxu0 %v220
    %254 = vmatprep.subr.mxu0 0.0
    %255 = vmatpush2.msra.mxu0 0.0
    %256 = vmatprep.subr.mxu0 0.0
    %257 = vmatpush2.msra.mxu0 0.0
    %258 = vmatprep.subr.mxu0 0.0
    %259 = vmatpush2.msra.mxu0 0.0
    %260 = vmatprep.subr.mxu0 0.0
    %261 = vmatpush2.msra.mxu0 0.0
    %262 = vmatprep.subr.mxu0 0.0
    %263 = vmatpush2.msra.mxu0 0.0
    %264 = vmatprep.subr.mxu0 0.0
    %265 = vmatpush2.msra.mxu0 0.0
    %266 = vmatprep.subr.mxu0 0.0
    %267 = vmatpush2.msra.mxu0 0.0
    %268 = vmatprep.subr.mxu0 0.0
    %269 = vmatpush2.msra.mxu0 0.0
    %270 = vmatprep.subr.mxu0 0.0
    %271 = vmatpush2.msra.mxu0 0.0
    %272 = vmatprep.subr.mxu0 0.0
    %273 = vmatpush2.msra.mxu0 0.0
    %274 = vmatprep.subr.mxu0 0.0
    %275 = vmatpush2.msra.mxu0 0.0
    %276 = vmatprep.subr.mxu0 0.0
    %277 = vmatpush2.msra.mxu0 0.0
    %278 = vmatprep.subr.mxu0 0.0
    %279 = vmatpush2.msra.mxu0 0.0
    %280 = vmatprep.subr.mxu0 0.0
    %281 = vmatpush2.msra.mxu0 0.0
    %282 = vmatprep.subr.mxu0 0.0
    %283 = vmatpush2.msra.mxu0 0.0
    %284 = vmatprep.subr.mxu0 0.0
    %285 = vmatpush2.msra.mxu0 0.0
    %286 = vmatprep.mubr.f32.mxu0 0.0
    %287 = vmatmul.mubr.f32.gmra.mxu0 %v139
    %v288 = vpop.f32.mrf.mxu0
    %v289 = vadd.f32 0.0, %v288
    %v290 = vpop.f32.mrf.mxu0
    %291 = vmatprep.mubr.f32.mxu0 0.0
    %292 = vmatmul.mubr.f32.gmra.mxu0 %v142
    %v293 = vpop.f32.mrf.mxu0
    %v294 = vadd.f32 0.0, %v293
    %v295 = vpop.f32.mrf.mxu0
    %296 = vdwg.mxu0
    %v299 = vunpack.c.l.b16 %v131
    %v300 = vunpack.c.l.b16 %v132
    %v301 = vpack.c.b16 %v300, %v299
    %v303 = vsel %vm137, %v301, 0
    %305 = vmatprep.subr.bf16.mxu0 0
    %306 = vmatpush1.bf16.msra.mxu0 0
    %307 = vmatprep.subr.bf16.mxu0 0
    %308 = vmatpush1.bf16.msra.mxu0 0
    %309 = vmatprep.subr.bf16.mxu0 0
    %310 = vmatpush1.bf16.msra.mxu0 0
    %311 = vmatprep.subr.bf16.mxu0 0
    %312 = vmatpush1.bf16.msra.mxu0 0
    %313 = vmatprep.subr.bf16.mxu0 0
    %314 = vmatpush1.bf16.msra.mxu0 0
    %315 = vmatprep.subr.bf16.mxu0 0
    %316 = vmatpush1.bf16.msra.mxu0 0
    %317 = vmatprep.subr.bf16.mxu0 0
    %318 = vmatpush1.bf16.msra.mxu0 0
    %319 = vmatprep.subr.bf16.mxu0 0
    %320 = vmatpush1.bf16.msra.mxu0 %v219
    %321 = vmatprep.subr.bf16.mxu0 0
    %322 = vmatpush2.bf16.msra.mxu0 0
    %323 = vmatprep.subr.bf16.mxu0 0
    %324 = vmatpush2.bf16.msra.mxu0 0
    %325 = vmatprep.subr.bf16.mxu0 0
    %326 = vmatpush2.bf16.msra.mxu0 0
    %327 = vmatprep.subr.bf16.mxu0 0
    %328 = vmatpush2.bf16.msra.mxu0 0
    %329 = vmatprep.subr.bf16.mxu0 0
    %330 = vmatpush2.bf16.msra.mxu0 0
    %331 = vmatprep.subr.bf16.mxu0 0
    %332 = vmatpush2.bf16.msra.mxu0 0
    %333 = vmatprep.subr.bf16.mxu0 0
    %334 = vmatpush2.bf16.msra.mxu0 0
    %335 = vmatprep.subr.bf16.mxu0 0
    %336 = vmatpush2.bf16.msra.mxu0 0
    %337 = vmatprep.mubr.bf16.mxu0 0
    %338 = vmatmul.mubr.bf16.gmra.mxu0 %v303
    %v339 = vpop.f32.mrf.mxu0
    %v340 = vadd.f32 %v289, %v339
    %v341 = vpop.f32.mrf.mxu0
    %v342 = vpop.f32.mrf.mxu0
    %v343 = vadd.f32 %v294, %v342
    %v344 = vpop.f32.mrf.mxu0
    %345 = vdwg.mxu0
    %v346 = vld [vmem:[%s5] sm:$0x1]
    %v348 = vlaneseq
    %v349 = vshrl.u32 %v348, 7
    %v350 = vsub.s32 0, %v349
    %v351 = vrot.slane %v346, %v350
    %v353 = vadd.f32 %v340, %v351
    %v354 = vadd.f32 %v343, %v351
    %v355 = vmax.f32 %v353, 0.0
    %v356 = vmax.f32 %v354, 0.0
    %vm357 = vcmask 261120
    %v358 = vsel %vm357, %v355, 0.0
    %v359 = vsel %vm357, %v356, 0.0
    %v360 = vadd.f32 %v358, %v359
    %v361 = vrot.slane %v360, 4
    %v362 = vadd.f32 %v360, %v361
    %v363 = vrot.slane %v362, 2
    %v364 = vadd.f32 %v362, %v363
    %v365 = vrot.slane %v364, 1
    %v366 = vadd.f32 %v364, %v365
    %v367 = vrcp.pop 16.0
    %v368 = vmul.f32 %v366, %v367
    %v369 = vsub.f32 %v355, %v368
    %v370 = vsub.f32 %v356, %v368
    %v371 = vmul.f32 %v369, %v369
    %v372 = vmul.f32 %v370, %v370
    %v373 = vsel %vm357, %v371, 0.0
    %v374 = vsel %vm357, %v372, 0.0
    %v375 = vadd.f32 %v373, %v374
    %v376 = vrot.slane %v375, 4
    %v377 = vadd.f32 %v375, %v376
    %v378 = vrot.slane %v377, 2
    %v379 = vadd.f32 %v377, %v378
    %v380 = vrot.slane %v379, 1
    %v381 = vadd.f32 %v379, %v380
    %v382 = vmul.f32 %v381, %v367
    %v383 = vld [vmem:[%s6] sm:$0x1]
    %v384 = vadd.f32 %v382, 1e-05
    %v385 = vrsqrt.pop %v384
    %v386 = vmul.f32 %v383, %v385
    %v388 = vlaneseq
    %v389 = vshrl.u32 %v388, 7
    %v390 = vsub.s32 0, %v389
    %v391 = vrot.slane %v386, %v390
    %v393 = vmul.f32 %v369, %v391
    %v394 = vmul.f32 %v370, %v391
    %v395 = vld [vmem:[%s7] sm:$0x1]
    %v397 = vlaneseq
    %v398 = vshrl.u32 %v397, 7
    %v399 = vsub.s32 0, %v398
    %v400 = vrot.slane %v395, %v399
    %v402 = vadd.f32 %v393, %v400
    %v403 = vadd.f32 %v394, %v400
    %v404 = vld [vmem:[#allocation10] sm:$0xff]
    %v405 = vld [vmem:[#allocation10 + $0x8] sm:$0xff]
    %v406 = vld [vmem:[#allocation10 + $0x10] sm:$0xff]
    %v407 = vld [vmem:[#allocation10 + $0x18] sm:$0xff]
    %v409 = vsel %vm357, %v402, 0
    %v412 = vsel %vm357, %v403, 0
    %414 = vmatprep.subr.mxu0 0.0
    %415 = vmatpush1.msra.mxu0 0.0
    %416 = vmatprep.subr.mxu0 0.0
    %417 = vmatpush1.msra.mxu0 0.0
    %418 = vmatprep.subr.mxu0 0.0
    %419 = vmatpush1.msra.mxu0 0.0
    %420 = vmatprep.subr.mxu0 0.0
    %421 = vmatpush1.msra.mxu0 0.0
    %422 = vmatprep.subr.mxu0 0.0
    %423 = vmatpush1.msra.mxu0 0.0
    %424 = vmatprep.subr.mxu0 0.0
    %425 = vmatpush1.msra.mxu0 0.0
    %426 = vmatprep.subr.mxu0 0.0
    %427 = vmatpush1.msra.mxu0 0.0
    %428 = vmatprep.subr.mxu0 0.0
    %429 = vmatpush1.msra.mxu0 0.0
    %430 = vmatprep.subr.mxu0 0.0
    %431 = vmatpush1.msra.mxu0 0.0
    %432 = vmatprep.subr.mxu0 0.0
    %433 = vmatpush1.msra.mxu0 0.0
    %434 = vmatprep.subr.mxu0 0.0
    %435 = vmatpush1.msra.mxu0 0.0
    %436 = vmatprep.subr.mxu0 0.0
    %437 = vmatpush1.msra.mxu0 0.0
    %438 = vmatprep.subr.mxu0 0.0
    %439 = vmatpush1.msra.mxu0 %v407
    %440 = vmatprep.subr.mxu0 0.0
    %441 = vmatpush1.msra.mxu0 %v406
    %442 = vmatprep.subr.mxu0 0.0
    %443 = vmatpush1.msra.mxu0 %v405
    %444 = vmatprep.subr.mxu0 0.0
    %445 = vmatpush1.msra.mxu0 %v404
    %446 = vmatprep.subr.mxu0 0.0
    %447 = vmatpush2.msra.mxu0 0.0
    %448 = vmatprep.subr.mxu0 0.0
    %449 = vmatpush2.msra.mxu0 0.0
    %450 = vmatprep.subr.mxu0 0.0
    %451 = vmatpush2.msra.mxu0 0.0
    %452 = vmatprep.subr.mxu0 0.0
    %453 = vmatpush2.msra.mxu0 0.0
    %454 = vmatprep.subr.mxu0 0.0
    %455 = vmatpush2.msra.mxu0 0.0
    %456 = vmatprep.subr.mxu0 0.0
    %457 = vmatpush2.msra.mxu0 0.0
    %458 = vmatprep.subr.mxu0 0.0
    %459 = vmatpush2.msra.mxu0 0.0
    %460 = vmatprep.subr.mxu0 0.0
    %461 = vmatpush2.msra.mxu0 0.0
    %462 = vmatprep.subr.mxu0 0.0
    %463 = vmatpush2.msra.mxu0 0.0
    %464 = vmatprep.subr.mxu0 0.0
    %465 = vmatpush2.msra.mxu0 0.0
    %466 = vmatprep.subr.mxu0 0.0
    %467 = vmatpush2.msra.mxu0 0.0
    %468 = vmatprep.subr.mxu0 0.0
    %469 = vmatpush2.msra.mxu0 0.0
    %470 = vmatprep.subr.mxu0 0.0
    %471 = vmatpush2.msra.mxu0 0.0
    %472 = vmatprep.subr.mxu0 0.0
    %473 = vmatpush2.msra.mxu0 0.0
    %474 = vmatprep.subr.mxu0 0.0
    %475 = vmatpush2.msra.mxu0 0.0
    %476 = vmatprep.subr.mxu0 0.0
    %477 = vmatpush2.msra.mxu0 0.0
    %478 = vmatprep.mubr.f32.mxu0 0.0
    %479 = vmatmul.mubr.f32.gmra.mxu0 %v409
    %v480 = vpop.f32.mrf.mxu0
    %v481 = vadd.f32 0.0, %v480
    %v482 = vpop.f32.mrf.mxu0
    %483 = vmatprep.mubr.f32.mxu0 0.0
    %484 = vmatmul.mubr.f32.gmra.mxu0 %v412
    %v485 = vpop.f32.mrf.mxu0
    %v486 = vadd.f32 0.0, %v485
    %v487 = vpop.f32.mrf.mxu0
    %488 = vdwg.mxu0
    %v489 = vpack.c.bf16 %v486, %v481
    %v490 = vld [vmem:[#allocation11] sm:$0xff]
    %v491 = vld [vmem:[#allocation11 + $0x8] sm:$0xff]
    %v492 = vld [vmem:[#allocation11 + $0x10] sm:$0xff]
    %v493 = vld [vmem:[#allocation11 + $0x18] sm:$0xff]
    %494 = vmatprep.subr.mxu0 0.0
    %495 = vmatpush1.msra.mxu0 0.0
    %496 = vmatprep.subr.mxu0 0.0
    %497 = vmatpush1.msra.mxu0 0.0
    %498 = vmatprep.subr.mxu0 0.0
    %499 = vmatpush1.msra.mxu0 0.0
    %500 = vmatprep.subr.mxu0 0.0
    %501 = vmatpush1.msra.mxu0 0.0
    %502 = vmatprep.subr.mxu0 0.0
    %503 = vmatpush1.msra.mxu0 0.0
    %504 = vmatprep.subr.mxu0 0.0
    %505 = vmatpush1.msra.mxu0 0.0
    %506 = vmatprep.subr.mxu0 0.0
    %507 = vmatpush1.msra.mxu0 0.0
    %508 = vmatprep.subr.mxu0 0.0
    %509 = vmatpush1.msra.mxu0 0.0
    %510 = vmatprep.subr.mxu0 0.0
    %511 = vmatpush1.msra.mxu0 0.0
    %512 = vmatprep.subr.mxu0 0.0
    %513 = vmatpush1.msra.mxu0 0.0
    %514 = vmatprep.subr.mxu0 0.0
    %515 = vmatpush1.msra.mxu0 0.0
    %516 = vmatprep.subr.mxu0 0.0
    %517 = vmatpush1.msra.mxu0 0.0
    %518 = vmatprep.subr.mxu0 0.0
    %519 = vmatpush1.msra.mxu0 %v493
    %520 = vmatprep.subr.mxu0 0.0
    %521 = vmatpush1.msra.mxu0 %v492
    %522 = vmatprep.subr.mxu0 0.0
    %523 = vmatpush1.msra.mxu0 %v491
    %524 = vmatprep.subr.mxu0 0.0
    %525 = vmatpush1.msra.mxu0 %v490
    %526 = vmatprep.subr.mxu0 0.0
    %527 = vmatpush2.msra.mxu0 0.0
    %528 = vmatprep.subr.mxu0 0.0
    %529 = vmatpush2.msra.mxu0 0.0
    %530 = vmatprep.subr.mxu0 0.0
    %531 = vmatpush2.msra.mxu0 0.0
    %532 = vmatprep.subr.mxu0 0.0
    %533 = vmatpush2.msra.mxu0 0.0
    %534 = vmatprep.subr.mxu0 0.0
    %535 = vmatpush2.msra.mxu0 0.0
    %536 = vmatprep.subr.mxu0 0.0
    %537 = vmatpush2.msra.mxu0 0.0
    %538 = vmatprep.subr.mxu0 0.0
    %539 = vmatpush2.msra.mxu0 0.0
    %540 = vmatprep.subr.mxu0 0.0
    %541 = vmatpush2.msra.mxu0 0.0
    %542 = vmatprep.subr.mxu0 0.0
    %543 = vmatpush2.msra.mxu0 0.0
    %544 = vmatprep.subr.mxu0 0.0
    %545 = vmatpush2.msra.mxu0 0.0
    %546 = vmatprep.subr.mxu0 0.0
    %547 = vmatpush2.msra.mxu0 0.0
    %548 = vmatprep.subr.mxu0 0.0
    %549 = vmatpush2.msra.mxu0 0.0
    %550 = vmatprep.subr.mxu0 0.0
    %551 = vmatpush2.msra.mxu0 0.0
    %552 = vmatprep.subr.mxu0 0.0
    %553 = vmatpush2.msra.mxu0 0.0
    %554 = vmatprep.subr.mxu0 0.0
    %555 = vmatpush2.msra.mxu0 0.0
    %556 = vmatprep.subr.mxu0 0.0
    %557 = vmatpush2.msra.mxu0 0.0
    %558 = vmatprep.mubr.f32.mxu0 0.0
    %559 = vmatmul.mubr.f32.gmra.mxu0 %v409
    %v560 = vpop.f32.mrf.mxu0
    %v561 = vadd.f32 0.0, %v560
    %v562 = vpop.f32.mrf.mxu0
    %563 = vmatprep.mubr.f32.mxu0 0.0
    %564 = vmatmul.mubr.f32.gmra.mxu0 %v412
    %v565 = vpop.f32.mrf.mxu0
    %v566 = vadd.f32 0.0, %v565
    %v567 = vpop.f32.mrf.mxu0
    %568 = vdwg.mxu0
    %569 = vmatprep.subr.bf16.mxu0 0
    %570 = vmatpush1.bf16.msra.mxu0 0
    %571 = vmatprep.subr.bf16.mxu0 0
    %572 = vmatpush1.bf16.msra.mxu0 0
    %573 = vmatprep.subr.bf16.mxu0 0
    %574 = vmatpush1.bf16.msra.mxu0 0
    %575 = vmatprep.subr.bf16.mxu0 0
    %576 = vmatpush1.bf16.msra.mxu0 0
    %577 = vmatprep.subr.bf16.mxu0 0
    %578 = vmatpush1.bf16.msra.mxu0 0
    %579 = vmatprep.subr.bf16.mxu0 0
    %580 = vmatpush1.bf16.msra.mxu0 0
    %581 = vmatprep.subr.bf16.mxu0 0
    %582 = vmatpush1.bf16.msra.mxu0 0
    %583 = vmatprep.subr.bf16.mxu0 0
    %584 = vmatpush1.bf16.msra.mxu0 %v489
    %585 = vmatprep.subr.bf16.mxu0 0
    %586 = vmatpush2.bf16.msra.mxu0 0
    %587 = vmatprep.subr.bf16.mxu0 0
    %588 = vmatpush2.bf16.msra.mxu0 0
    %589 = vmatprep.subr.bf16.mxu0 0
    %590 = vmatpush2.bf16.msra.mxu0 0
    %591 = vmatprep.subr.bf16.mxu0 0
    %592 = vmatpush2.bf16.msra.mxu0 0
    %593 = vmatprep.subr.bf16.mxu0 0
    %594 = vmatpush2.bf16.msra.mxu0 0
    %595 = vmatprep.subr.bf16.mxu0 0
    %596 = vmatpush2.bf16.msra.mxu0 0
    %597 = vmatprep.subr.bf16.mxu0 0
    %598 = vmatpush2.bf16.msra.mxu0 0
    %599 = vmatprep.subr.bf16.mxu0 0
    %600 = vmatpush2.bf16.msra.mxu0 0
    %601 = vmatprep.mubr.bf16.mxu0 0
    %602 = vmatmul.mubr.bf16.gmra.mxu0 %v303
    %v603 = vpop.f32.mrf.mxu0
    %v604 = vadd.f32 %v561, %v603
    %v605 = vpop.f32.mrf.mxu0
    %v606 = vpop.f32.mrf.mxu0
    %v607 = vadd.f32 %v566, %v606
    %v608 = vpop.f32.mrf.mxu0
    %609 = vdwg.mxu0
    %v610 = vld [vmem:[%s10] sm:$0x1]
    %v612 = vlaneseq
    %v613 = vshrl.u32 %v612, 7
    %v614 = vsub.s32 0, %v613
    %v615 = vrot.slane %v610, %v614
    %v617 = vadd.f32 %v604, %v615
    %v618 = vadd.f32 %v607, %v615
    %v619 = vmax.f32 %v617, 0.0
    %v620 = vmax.f32 %v618, 0.0
    %v621 = vsel %vm357, %v619, 0.0
    %v622 = vsel %vm357, %v620, 0.0
    %v623 = vadd.f32 %v621, %v622
    %v624 = vrot.slane %v623, 4
    %v625 = vadd.f32 %v623, %v624
    %v626 = vrot.slane %v625, 2
    %v627 = vadd.f32 %v625, %v626
    %v628 = vrot.slane %v627, 1
    %v629 = vadd.f32 %v627, %v628
    %v630 = vmul.f32 %v629, %v367
    %v631 = vsub.f32 %v619, %v630
    %v632 = vsub.f32 %v620, %v630
    %v633 = vmul.f32 %v631, %v631
    %v634 = vmul.f32 %v632, %v632
    %v635 = vsel %vm357, %v633, 0.0
    %v636 = vsel %vm357, %v634, 0.0
    %v637 = vadd.f32 %v635, %v636
    %v638 = vrot.slane %v637, 4
    %v639 = vadd.f32 %v637, %v638
    %v640 = vrot.slane %v639, 2
    %v641 = vadd.f32 %v639, %v640
    %v642 = vrot.slane %v641, 1
    %v643 = vadd.f32 %v641, %v642
    %v644 = vmul.f32 %v643, %v367
    %v645 = vld [vmem:[%s11] sm:$0x1]
    %v646 = vadd.f32 %v644, 1e-05
    %v647 = vrsqrt.pop %v646
    %v648 = vmul.f32 %v645, %v647
    %v650 = vlaneseq
    %v651 = vshrl.u32 %v650, 7
    %v652 = vsub.s32 0, %v651
    %v653 = vrot.slane %v648, %v652
    %v655 = vmul.f32 %v631, %v653
    %v656 = vmul.f32 %v632, %v653
    %v657 = vld [vmem:[%s12] sm:$0x1]
    %v659 = vlaneseq
    %v660 = vshrl.u32 %v659, 7
    %v661 = vsub.s32 0, %v660
    %v662 = vrot.slane %v657, %v661
    %v664 = vadd.f32 %v655, %v662
    %v665 = vadd.f32 %v656, %v662
    %668 = vrot.lane.b32.xlu0 %v664, 32
    %v669 = vpop.permute.xlu0 %668
    %670 = vrot.lane.b32.xlu0 %v665, 32
    %v671 = vpop.permute.xlu0 %670
    %v674 = vsel %vm357, %v402, %v669
    %v675 = vsel %vm357, %v403, %v671
    %vm676 = vcmask 523264
    %677 = vst.msk [vmem:[#allocation13] sm:$0xff] %vm676, %v674
    %678 = vst.msk [vmem:[#allocation13 + $0x8] sm:$0xff] %vm676, %v675
    %v679 = vld [vmem:[%s1] sm:$0x1]
    %v680 = vunpack.c.l.bf16 %v679
    %v682 = vsel %vm137, %v680, 0
    %684 = vmatprep.subr.mxu0 0.0
    %685 = vmatpush1.msra.mxu0 0.0
    %686 = vmatprep.subr.mxu0 0.0
    %687 = vmatpush1.msra.mxu0 0.0
    %688 = vmatprep.subr.mxu0 0.0
    %689 = vmatpush1.msra.mxu0 0.0
    %690 = vmatprep.subr.mxu0 0.0
    %691 = vmatpush1.msra.mxu0 0.0
    %692 = vmatprep.subr.mxu0 0.0
    %693 = vmatpush1.msra.mxu0 0.0
    %694 = vmatprep.subr.mxu0 0.0
    %695 = vmatpush1.msra.mxu0 0.0
    %696 = vmatprep.subr.mxu0 0.0
    %697 = vmatpush1.msra.mxu0 0.0
    %698 = vmatprep.subr.mxu0 0.0
    %699 = vmatpush1.msra.mxu0 0.0
    %700 = vmatprep.subr.mxu0 0.0
    %701 = vmatpush1.msra.mxu0 0.0
    %702 = vmatprep.subr.mxu0 0.0
    %703 = vmatpush1.msra.mxu0 0.0
    %704 = vmatprep.subr.mxu0 0.0
    %705 = vmatpush1.msra.mxu0 0.0
    %706 = vmatprep.subr.mxu0 0.0
    %707 = vmatpush1.msra.mxu0 0.0
    %708 = vmatprep.subr.mxu0 0.0
    %709 = vmatpush1.msra.mxu0 0.0
    %710 = vmatprep.subr.mxu0 0.0
    %711 = vmatpush1.msra.mxu0 0.0
    %712 = vmatprep.subr.mxu0 0.0
    %713 = vmatpush1.msra.mxu0 %v675
    %714 = vmatprep.subr.mxu0 0.0
    %715 = vmatpush1.msra.mxu0 %v674
    %716 = vmatprep.subr.mxu0 0.0
    %717 = vmatpush2.msra.mxu0 0.0
    %718 = vmatprep.subr.mxu0 0.0
    %719 = vmatpush2.msra.mxu0 0.0
    %720 = vmatprep.subr.mxu0 0.0
    %721 = vmatpush2.msra.mxu0 0.0
    %722 = vmatprep.subr.mxu0 0.0
    %723 = vmatpush2.msra.mxu0 0.0
    %724 = vmatprep.subr.mxu0 0.0
    %725 = vmatpush2.msra.mxu0 0.0
    %726 = vmatprep.subr.mxu0 0.0
    %727 = vmatpush2.msra.mxu0 0.0
    %728 = vmatprep.subr.mxu0 0.0
    %729 = vmatpush2.msra.mxu0 0.0
    %730 = vmatprep.subr.mxu0 0.0
    %731 = vmatpush2.msra.mxu0 0.0
    %732 = vmatprep.subr.mxu0 0.0
    %733 = vmatpush2.msra.mxu0 0.0
    %734 = vmatprep.subr.mxu0 0.0
    %735 = vmatpush2.msra.mxu0 0.0
    %736 = vmatprep.subr.mxu0 0.0
    %737 = vmatpush2.msra.mxu0 0.0
    %738 = vmatprep.subr.mxu0 0.0
    %739 = vmatpush2.msra.mxu0 0.0
    %740 = vmatprep.subr.mxu0 0.0
    %741 = vmatpush2.msra.mxu0 0.0
    %742 = vmatprep.subr.mxu0 0.0
    %743 = vmatpush2.msra.mxu0 0.0
    %744 = vmatprep.subr.mxu0 0.0
    %745 = vmatpush2.msra.mxu0 0.0
    %746 = vmatprep.subr.mxu0 0.0
    %747 = vmatpush2.msra.mxu0 0.0
    %748 = vmatprep.mubr.f32.mxu0 0.0
    %749 = vmatmul.mubr.f32.gmra.mxu0 %v682
    %v750 = vpop.f32.mrf.mxu0
    %v751 = vadd.f32 0.0, %v750
    %v752 = vpop.f32.mrf.mxu0
    %753 = vdwg.mxu0
    %vm754 = vcmask 517120
    %755 = vst.msk [vmem:[#allocation14] sm:$0x3] %vm754, %v751
    // Predicated region
    $region78: #{tpu_custom_call.1} parent=1 // pred_check
      _
    $region79: #{tpu_custom_call.1} parent=1 // pred_check_branch
      %757 = sbr.rel (0) target = $region81
    $region80: #{tpu_custom_call.1} parent=1 // pred_region
      %s759 = ssub.s32 256, 256
      %760 = vsyncadd [#allocation4], %s759
      %s761 = sshll.u32 [#allocation13], 4
      %s762 = int_to_ptr.vmem [resolvable:$true] %s761
      %767 = dma.vmem_to_hbm [thread:$0]  %s762, 256, %s13, [#allocation4], 128, 128, 8
    $region81: #{tpu_custom_call.1} parent=1 // pred_fallthru
      _
    // Predicated region
    $region82: #{tpu_custom_call.1} parent=1 // pred_check
      _
    $region83: #{tpu_custom_call.1} parent=1 // pred_check_branch
      %769 = sbr.rel (0) target = $region85
    $region84: #{tpu_custom_call.1} parent=1 // pred_region
      %s771 = ssub.s32 32, 32
      %772 = vsyncadd [#allocation15], %s771
      %s774 = sshll.u32 [#allocation14], 4
      %s775 = int_to_ptr.vmem [resolvable:$true] %s774
      %777 = dma.vmem_to_hbm [thread:$0]  %s775, 32, %s14, [#allocation15]
    $region85: #{tpu_custom_call.1} parent=1 // pred_fallthru
      _
    // Predicated region
    $region86: #{tpu_custom_call.1} parent=1 // pred_check
      _
    $region87: #{tpu_custom_call.1} parent=1 // pred_check_branch
      %779 = sbr.rel (0) target = $region89
    $region88: #{tpu_custom_call.1} parent=1 // pred_region
      %780 = dma.done [#allocation4], 256
    $region89: #{tpu_custom_call.1} parent=1 // pred_fallthru
      _
    // Predicated region
    $region90: #{tpu_custom_call.1} parent=1 // pred_check
      _
    $region91: #{tpu_custom_call.1} parent=1 // pred_check_branch
      %782 = sbr.rel (0) target = $region93
    $region92: #{tpu_custom_call.1} parent=1 // pred_region
      %783 = dma.done [#allocation15], 32
    $region93: #{tpu_custom_call.1} parent=1 // pred_fallthru
      _
    %784 = vsyncpa [#allocation3], 1
    %785 = vsyncpa [#allocation6], 1
    %786 = vsyncpa [#allocation9], 1
    %787 = vsyncpa [#allocation12], 1
    %788 = vsyncpa [#allocation4], 1
    %789 = vsyncpa [#allocation15], 1

</llo_original>
